<compile_context>
chip_gen: v5e
topology: v5e:2x2
jax: 0.10.0
libtpu: 0.0.40
codegen_flags: <defaults>
</compile_context>

<pallas_src>
import functools

import numpy as np
import jax
import jax.numpy as jnp
from jax.experimental import pallas as pl
from jax.experimental.pallas import tpu as pltpu

EPS = 1e-5
LANE = 128


# ---------------------------------------------------------------------------
# In-kernel helpers
# ---------------------------------------------------------------------------
def _bn_relu_wide(z, gamma, beta, ch_map, ch_bcast, inv_count):
    """Training-mode BatchNorm + ReLU on a (R, Lp) wide slab.

    z holds exact zeros in the halo / lane-pad columns, so they do not perturb
    the batch statistics; ch_bcast has zero columns there, so the result keeps
    exact zeros as well.
    """
    stats = jnp.concatenate(
        [jnp.sum(z, axis=0, keepdims=True),
         jnp.sum(z * z, axis=0, keepdims=True)], axis=0)                  # (2, Lp)
    ch_stats = jnp.dot(stats, ch_map, preferred_element_type=jnp.float32)  # (2, C)
    mean = ch_stats[0:1, :] * inv_count
    var = jnp.maximum(ch_stats[1:2, :] * inv_count - mean * mean, 0.0)     # biased
    scale = gamma * jax.lax.rsqrt(var + EPS)                               # (1, C)
    shift = beta - mean * scale                                            # (1, C)
    ss = jnp.concatenate([scale, shift], axis=0)                           # (2, C)
    ss_w = jnp.dot(ss, ch_bcast, preferred_element_type=jnp.float32)       # (2, Lp)
    return jnp.maximum(z * ss_w[0:1, :] + ss_w[1:2, :], 0.0)


def _conv3x3_rolled(z, mask_top, mask_bot, m_ref, bias):
    """SAME 3x3 conv: three banded matmuls; row taps via sublane roll + mask."""
    r = z.shape[0]
    z_up = (pltpu.roll(z, shift=1, axis=0) * mask_top).astype(jnp.bfloat16)
    z_dn = (pltpu.roll(z, shift=r - 1, axis=0) * mask_bot).astype(jnp.bfloat16)
    z_mid = z.astype(jnp.bfloat16)
    acc = jnp.dot(z_up, m_ref[0], preferred_element_type=jnp.float32)
    acc = acc + jnp.dot(z_mid, m_ref[1], preferred_element_type=jnp.float32)
    acc = acc + jnp.dot(z_dn, m_ref[2], preferred_element_type=jnp.float32)
    return acc + bias


# ---------------------------------------------------------------------------
# Kernel
# ---------------------------------------------------------------------------
def resunit_kernel(x_ref, mtop_ref, mbot_ref, chmap_ref, chbcast_ref,
                   g1_ref, be1_ref, m1_ref, b1_ref,
                   g2_ref, be2_ref, m2_ref, b2_ref,
                   o_ref, *, inv_count):
    chmap = chmap_ref[...]
    chbcast = chbcast_ref[...]
    mtop = mtop_ref[...]
    mbot = mbot_ref[...]

    # --- BN1 + ReLU + conv1 ---------------------------------------------------
    z = _bn_relu_wide(x_ref[...], g1_ref[...], be1_ref[...], chmap, chbcast,
                      inv_count)
    z = _conv3x3_rolled(z, mtop, mbot, m1_ref, b1_ref[...])

    # --- BN2 + ReLU + conv2 ---------------------------------------------------
    z = _bn_relu_wide(z, g2_ref[...], be2_ref[...], chmap, chbcast, inv_count)
    z = _conv3x3_rolled(z, mtop, mbot, m2_ref, b2_ref[...])

    # Residual: re-read x from VMEM instead of keeping it live across the body.
    o_ref[...] = z + x_ref[...]


# ---------------------------------------------------------------------------
# Host-side constant builders (pure weight re-layout, done once)
# ---------------------------------------------------------------------------
def _banded_conv_weights(w_oihw, width, lanes):
    """torch (Cout, Cin, 3, 3) -> 3 banded (lanes, lanes) bf16 matrices
    (one per ky tap) acting on W-flattened, W-halo-padded, lane-padded rows."""
    w = np.asarray(jax.device_get(w_oihw), np.float32)
    c_out, c_in, _, _ = w.shape
    m = np.zeros((3, lanes, lanes), np.float32)
    for ky in range(3):
        for wo in range(width):                 # output pixel column
            for kx in range(3):
                wp = wo + kx                    # padded input column
                m[ky,
                  wp * c_in:(wp + 1) * c_in,
                  (wo + 1) * c_out:(wo + 2) * c_out] = w[:, :, ky, kx].T
    return jnp.asarray(m, jnp.bfloat16)


def _wide_bias(b, c, width, lanes):
    bias = np.zeros((1, lanes), np.float32)
    bn = np.asarray(jax.device_get(b), np.float32)
    for wo in range(1, width + 1):
        bias[0, wo * c:(wo + 1) * c] = bn       # zero on halo / pad columns
    return jnp.asarray(bias)


def _channel_sum_map(c, width, lanes):
    # (lanes, C): sums the padded-width copies of each channel (halo columns
    # hold zero data; lane-pad rows are zero).
    m = np.zeros((lanes, c), np.float32)
    for wo in range(width + 2):
        m[wo * c:(wo + 1) * c, :] = np.eye(c, dtype=np.float32)
    return jnp.asarray(m)


def _channel_bcast_map(c, width, lanes):
    # (C, lanes): broadcasts a per-channel scalar to the real pixel columns
    # only (zero on halo / lane-pad columns so they stay exactly zero).
    m = np.zeros((c, lanes), np.float32)
    for wo in range(1, width + 1):
        m[:, wo * c:(wo + 1) * c] = np.eye(c, dtype=np.float32)
    return jnp.asarray(m)


def _row_masks(n, h, lanes):
    # 0/1 masks zeroing the rolled-in rows at every image's top / bottom edge.
    r = n * h
    mt = np.ones((r, lanes), np.float32)
    mb = np.ones((r, lanes), np.float32)
    for i in range(n):
        mt[i * h, :] = 0.0                      # output row h==0: no ky=0 tap
        mb[i * h + h - 1, :] = 0.0              # output row h==H-1: no ky=2 tap
    return jnp.asarray(mt), jnp.asarray(mb)


# ---------------------------------------------------------------------------
# Wrapper
# ---------------------------------------------------------------------------
def resunit_forward(x_nchw, params):
    """x_nchw: (N, C, H, W) float32; params hold PyTorch-layout weights."""
    N, C, H, W = x_nchw.shape
    L = (W + 2) * C
    Lp = ((L + LANE - 1) // LANE) * LANE        # lane-pad to a multiple of 128
    R = N * H

    # NHWC, zero-pad W by 1 pixel, flatten (W+2, C) onto lanes, pad to Lp.
    x = jnp.transpose(x_nchw, (0, 2, 3, 1)).astype(jnp.float32)
    x_wide = jnp.pad(x, ((0, 0), (0, 0), (1, 1), (0, 0))).reshape(R, L)
    x_wide = jnp.pad(x_wide, ((0, 0), (0, Lp - L)))

    m1 = _banded_conv_weights(params["w1"], W, Lp)
    m2 = _banded_conv_weights(params["w2"], W, Lp)
    b1 = _wide_bias(params["b1"], C, W, Lp)
    b2 = _wide_bias(params["b2"], C, W, Lp)
    chmap = _channel_sum_map(C, W, Lp)
    chbcast = _channel_bcast_map(C, W, Lp)
    mtop, mbot = _row_masks(N, H, Lp)
    g1 = params["bn1_g"].astype(jnp.float32).reshape(1, C)
    be1 = params["bn1_b"].astype(jnp.float32).reshape(1, C)
    g2 = params["bn2_g"].astype(jnp.float32).reshape(1, C)
    be2 = params["bn2_b"].astype(jnp.float32).reshape(1, C)

    vmem = pl.BlockSpec(memory_space=pltpu.MemorySpace.VMEM)
    kernel = functools.partial(resunit_kernel, inv_count=1.0 / float(N * H * W))
    out_wide = pl.pallas_call(
        kernel,
        out_shape=jax.ShapeDtypeStruct((R, Lp), jnp.float32),
        in_specs=[vmem] * 13,
        out_specs=vmem,
        input_output_aliases={0: 0},            # output reuses x_wide's buffer
        compiler_params=pltpu.CompilerParams(vmem_limit_bytes=32 * 1024 * 1024),
    )(x_wide, mtop, mbot, chmap, chbcast, g1, be1, m1, b1, g2, be2, m2, b2)

    # TODO(synk): when stacking ResUnits (STResNet), keep activations in the
    # wide (N*H, Lp) layout between units and only convert at network edges.
    out = out_wide[:, :L].reshape(N, H, W + 2, C)[:, :, 1:W + 1, :]
    return jnp.transpose(out, (0, 3, 1, 2))     # back to NCHW


# ---------------------------------------------------------------------------
# Pure-JAX reference (NCHW, matching the PyTorch forward)
# ---------------------------------------------------------------------------
def resunit_ref(x, p):
    def bn(z, g, b):
        m = jnp.mean(z, axis=(0, 2, 3), keepdims=True)
        v = jnp.mean((z - m) ** 2, axis=(0, 2, 3), keepdims=True)
        return (z - m) * jax.lax.rsqrt(v + EPS) * g.reshape(1, -1, 1, 1) \
            + b.reshape(1, -1, 1, 1)

    def conv(z, w, b):
        y = jax.lax.conv_general_dilated(
            z, w, window_strides=(1, 1), padding=((1, 1), (1, 1)),
            dimension_numbers=("NCHW", "OIHW", "NCHW"),
            precision=jax.lax.Precision.HIGHEST)
        return y + b.reshape(1, -1, 1, 1)

    z = jax.nn.relu(bn(x, p["bn1_g"], p["bn1_b"]))
    z = conv(z, p["w1"], p["b1"])
    z = jax.nn.relu(bn(z, p["bn2_g"], p["bn2_b"]))
    z = conv(z, p["w2"], p["b2"])
    return z + x


if __name__ == "__main__":
    # in_channels == out_channels (required by the residual add in ResUnit)
    N, C, H, W = 2, 4, 16, 16
    key = jax.random.PRNGKey(0)
    k = jax.random.split(key, 9)

    x = jax.random.normal(k[0], (N, C, H, W), jnp.float32)
    params = {
        "w1": 0.2 * jax.random.normal(k[1], (C, C, 3, 3), jnp.float32),
        "b1": 0.1 * jax.random.normal(k[2], (C,), jnp.float32),
        "w2": 0.2 * jax.random.normal(k[3], (C, C, 3, 3), jnp.float32),
        "b2": 0.1 * jax.random.normal(k[4], (C,), jnp.float32),
        "bn1_g": 1.0 + 0.1 * jax.random.normal(k[5], (C,), jnp.float32),
        "bn1_b": 0.1 * jax.random.normal(k[6], (C,), jnp.float32),
        "bn2_g": 1.0 + 0.1 * jax.random.normal(k[7], (C,), jnp.float32),
        "bn2_b": 0.1 * jax.random.normal(k[8], (C,), jnp.float32),
    }

    out = resunit_forward(x, params)
    jax.block_until_ready(out)

    ref = resunit_ref(x, params)
    assert out.shape == (N, C, H, W)
    # bf16 MXU operands (f32 accumulation) -> slightly relaxed tolerance vs f32.
    assert jnp.allclose(out, ref, atol=3e-2, rtol=3e-2), \
        f"max err {jnp.max(jnp.abs(out - ref))}"

    print("KERNEL_OK")
</pallas_src>

<mosaic_0001>
module attributes {stable_mosaic.version = 11 : i64} {
  func.func @resunit_kernel(%arg0: memref<32x128xf32, #tpu.memory_space<vmem>>, %arg1: memref<32x128xf32, #tpu.memory_space<vmem>>, %arg2: memref<32x128xf32, #tpu.memory_space<vmem>>, %arg3: memref<128x4xf32, #tpu.memory_space<vmem>>, %arg4: memref<4x128xf32, #tpu.memory_space<vmem>>, %arg5: memref<1x4xf32, #tpu.memory_space<vmem>>, %arg6: memref<1x4xf32, #tpu.memory_space<vmem>>, %arg7: memref<3x128x128xbf16, #tpu.memory_space<vmem>>, %arg8: memref<1x128xf32, #tpu.memory_space<vmem>>, %arg9: memref<1x4xf32, #tpu.memory_space<vmem>>, %arg10: memref<1x4xf32, #tpu.memory_space<vmem>>, %arg11: memref<3x128x128xbf16, #tpu.memory_space<vmem>>, %arg12: memref<1x128xf32, #tpu.memory_space<vmem>>, %arg13: memref<32x128xf32, #tpu.memory_space<vmem>>) attributes {dimension_semantics = [], scalar_prefetch = 0 : i64, scratch_operands = 0 : i64, tpu.core_type = #tpu.core_type<tc>} {
    %c0 = arith.constant 0 : index
    %c0_0 = arith.constant 0 : index
    %0 = vector.load %arg3[%c0, %c0_0] : memref<128x4xf32, #tpu.memory_space<vmem>>, vector<128x4xf32>
    %c0_1 = arith.constant 0 : index
    %c0_2 = arith.constant 0 : index
    %1 = vector.load %arg4[%c0_1, %c0_2] : memref<4x128xf32, #tpu.memory_space<vmem>>, vector<4x128xf32>
    %c0_3 = arith.constant 0 : index
    %c0_4 = arith.constant 0 : index
    %2 = vector.load %arg1[%c0_3, %c0_4] : memref<32x128xf32, #tpu.memory_space<vmem>>, vector<32x128xf32>
    %c0_5 = arith.constant 0 : index
    %c0_6 = arith.constant 0 : index
    %3 = vector.load %arg2[%c0_5, %c0_6] : memref<32x128xf32, #tpu.memory_space<vmem>>, vector<32x128xf32>
    %c0_7 = arith.constant 0 : index
    %c0_8 = arith.constant 0 : index
    %4 = vector.load %arg0[%c0_7, %c0_8] : memref<32x128xf32, #tpu.memory_space<vmem>>, vector<32x128xf32>
    %c0_9 = arith.constant 0 : index
    %c0_10 = arith.constant 0 : index
    %5 = vector.load %arg5[%c0_9, %c0_10] : memref<1x4xf32, #tpu.memory_space<vmem>>, vector<1x4xf32>
    %c0_11 = arith.constant 0 : index
    %c0_12 = arith.constant 0 : index
    %6 = vector.load %arg6[%c0_11, %c0_12] : memref<1x4xf32, #tpu.memory_space<vmem>>, vector<1x4xf32>
    %cst = arith.constant dense<0.000000e+00> : vector<128xf32>
    %7 = vector.multi_reduction <add>, %4, %cst [0] : vector<32x128xf32> to vector<128xf32>
    %8 = vector.shape_cast %7 : vector<128xf32> to vector<1x128xf32>
    %9 = arith.mulf %4, %4 : vector<32x128xf32>
    %cst_13 = arith.constant dense<0.000000e+00> : vector<128xf32>
    %10 = vector.multi_reduction <add>, %9, %cst_13 [0] : vector<32x128xf32> to vector<128xf32>
    %11 = vector.shape_cast %10 : vector<128xf32> to vector<1x128xf32>
    %12 = tpu.concatenate %8, %11 in 0 : vector<1x128xf32>, vector<1x128xf32> -> vector<2x128xf32>
    %cst_14 = arith.constant dense<0.000000e+00> : vector<2x4xf32>
    %13 = tpu.matmul %12, %0, %cst_14 {dimension_numbers = #tpu.dot_dimension_numbers<[1], [0], [0], [1], [0, 0, 1, 1], [], []>} : vector<2x128xf32>, vector<128x4xf32>, vector<2x4xf32> -> vector<2x4xf32>
    %14 = vector.extract_strided_slice %13 {offsets = [0, 0], sizes = [1, 4], strides = [1, 1]} : vector<2x4xf32> to vector<1x4xf32>
    %cst_15 = arith.constant 0.001953125 : f32
    %15 = vector.broadcast %cst_15 : f32 to vector<1x4xf32>
    %16 = arith.mulf %14, %15 : vector<1x4xf32>
    %17 = vector.extract_strided_slice %13 {offsets = [1, 0], sizes = [1, 4], strides = [1, 1]} : vector<2x4xf32> to vector<1x4xf32>
    %cst_16 = arith.constant 0.001953125 : f32
    %18 = vector.broadcast %cst_16 : f32 to vector<1x4xf32>
    %19 = arith.mulf %17, %18 : vector<1x4xf32>
    %20 = arith.mulf %16, %16 : vector<1x4xf32>
    %21 = arith.subf %19, %20 : vector<1x4xf32>
    %cst_17 = arith.constant 0.000000e+00 : f32
    %22 = vector.broadcast %cst_17 : f32 to vector<1x4xf32>
    %23 = arith.maximumf %21, %22 : vector<1x4xf32>
    %cst_18 = arith.constant 9.99999974E-6 : f32
    %24 = vector.broadcast %cst_18 : f32 to vector<1x4xf32>
    %25 = arith.addf %23, %24 : vector<1x4xf32>
    %26 = math.rsqrt %25 : vector<1x4xf32>
    %27 = arith.mulf %5, %26 : vector<1x4xf32>
    %28 = arith.mulf %16, %27 : vector<1x4xf32>
    %29 = arith.subf %6, %28 : vector<1x4xf32>
    %30 = tpu.concatenate %27, %29 in 0 : vector<1x4xf32>, vector<1x4xf32> -> vector<2x4xf32>
    %cst_19 = arith.constant dense<0.000000e+00> : vector<2x128xf32>
    %31 = tpu.matmul %30, %1, %cst_19 {dimension_numbers = #tpu.dot_dimension_numbers<[1], [0], [0], [1], [0, 0, 1, 1], [], []>} : vector<2x4xf32>, vector<4x128xf32>, vector<2x128xf32> -> vector<2x128xf32>
    %32 = vector.extract_strided_slice %31 {offsets = [0, 0], sizes = [1, 128], strides = [1, 1]} : vector<2x128xf32> to vector<1x128xf32>
    %33 = vector.broadcast %32 : vector<1x128xf32> to vector<32x128xf32>
    %34 = arith.mulf %4, %33 : vector<32x128xf32>
    %35 = vector.extract_strided_slice %31 {offsets = [1, 0], sizes = [1, 128], strides = [1, 1]} : vector<2x128xf32> to vector<1x128xf32>
    %36 = vector.broadcast %35 : vector<1x128xf32> to vector<32x128xf32>
    %37 = arith.addf %34, %36 : vector<32x128xf32>
    %cst_20 = arith.constant 0.000000e+00 : f32
    %38 = vector.broadcast %cst_20 : f32 to vector<32x128xf32>
    %39 = arith.maximumf %37, %38 : vector<32x128xf32>
    %c0_21 = arith.constant 0 : index
    %c0_22 = arith.constant 0 : index
    %40 = vector.load %arg8[%c0_21, %c0_22] : memref<1x128xf32, #tpu.memory_space<vmem>>, vector<1x128xf32>
    %c1_i32 = arith.constant 1 : i32
    %41 = tpu.dynamic_rotate %39 by %c1_i32 dim 0 : vector<32x128xf32>, i32 -> vector<32x128xf32>
    %42 = arith.mulf %41, %2 : vector<32x128xf32>
    %43 = arith.truncf %42 : vector<32x128xf32> to vector<32x128xbf16>
    %c31_i32 = arith.constant 31 : i32
    %44 = tpu.dynamic_rotate %39 by %c31_i32 dim 0 : vector<32x128xf32>, i32 -> vector<32x128xf32>
    %45 = arith.mulf %44, %3 : vector<32x128xf32>
    %46 = arith.truncf %45 : vector<32x128xf32> to vector<32x128xbf16>
    %47 = arith.truncf %39 : vector<32x128xf32> to vector<32x128xbf16>
    %c0_23 = arith.constant 0 : index
    %c0_24 = arith.constant 0 : index
    %c0_25 = arith.constant 0 : index
    %48 = vector.load %arg7[%c0_23, %c0_24, %c0_25] : memref<3x128x128xbf16, #tpu.memory_space<vmem>>, vector<1x128x128xbf16>
    %49 = vector.shape_cast %48 : vector<1x128x128xbf16> to vector<128x128xbf16>
    %cst_26 = arith.constant dense<0.000000e+00> : vector<32x128xf32>
    %50 = tpu.matmul %43, %49, %cst_26 {dimension_numbers = #tpu.dot_dimension_numbers<[1], [0], [0], [1], [0, 0, 1, 1], [], []>} : vector<32x128xbf16>, vector<128x128xbf16>, vector<32x128xf32> -> vector<32x128xf32>
    %c1 = arith.constant 1 : index
    %c0_27 = arith.constant 0 : index
    %c0_28 = arith.constant 0 : index
    %51 = vector.load %arg7[%c1, %c0_27, %c0_28] : memref<3x128x128xbf16, #tpu.memory_space<vmem>>, vector<1x128x128xbf16>
    %52 = vector.shape_cast %51 : vector<1x128x128xbf16> to vector<128x128xbf16>
    %cst_29 = arith.constant dense<0.000000e+00> : vector<32x128xf32>
    %53 = tpu.matmul %47, %52, %cst_29 {dimension_numbers = #tpu.dot_dimension_numbers<[1], [0], [0], [1], [0, 0, 1, 1], [], []>} : vector<32x128xbf16>, vector<128x128xbf16>, vector<32x128xf32> -> vector<32x128xf32>
    %54 = arith.addf %50, %53 : vector<32x128xf32>
    %c2 = arith.constant 2 : index
    %c0_30 = arith.constant 0 : index
    %c0_31 = arith.constant 0 : index
    %55 = vector.load %arg7[%c2, %c0_30, %c0_31] : memref<3x128x128xbf16, #tpu.memory_space<vmem>>, vector<1x128x128xbf16>
    %56 = vector.shape_cast %55 : vector<1x128x128xbf16> to vector<128x128xbf16>
    %cst_32 = arith.constant dense<0.000000e+00> : vector<32x128xf32>
    %57 = tpu.matmul %46, %56, %cst_32 {dimension_numbers = #tpu.dot_dimension_numbers<[1], [0], [0], [1], [0, 0, 1, 1], [], []>} : vector<32x128xbf16>, vector<128x128xbf16>, vector<32x128xf32> -> vector<32x128xf32>
    %58 = arith.addf %54, %57 : vector<32x128xf32>
    %59 = vector.broadcast %40 : vector<1x128xf32> to vector<32x128xf32>
    %60 = arith.addf %58, %59 : vector<32x128xf32>
    %c0_33 = arith.constant 0 : index
    %c0_34 = arith.constant 0 : index
    %61 = vector.load %arg9[%c0_33, %c0_34] : memref<1x4xf32, #tpu.memory_space<vmem>>, vector<1x4xf32>
    %c0_35 = arith.constant 0 : index
    %c0_36 = arith.constant 0 : index
    %62 = vector.load %arg10[%c0_35, %c0_36] : memref<1x4xf32, #tpu.memory_space<vmem>>, vector<1x4xf32>
    %cst_37 = arith.constant dense<0.000000e+00> : vector<128xf32>
    %63 = vector.multi_reduction <add>, %60, %cst_37 [0] : vector<32x128xf32> to vector<128xf32>
    %64 = vector.shape_cast %63 : vector<128xf32> to vector<1x128xf32>
    %65 = arith.mulf %60, %60 : vector<32x128xf32>
    %cst_38 = arith.constant dense<0.000000e+00> : vector<128xf32>
    %66 = vector.multi_reduction <add>, %65, %cst_38 [0] : vector<32x128xf32> to vector<128xf32>
    %67 = vector.shape_cast %66 : vector<128xf32> to vector<1x128xf32>
    %68 = tpu.concatenate %64, %67 in 0 : vector<1x128xf32>, vector<1x128xf32> -> vector<2x128xf32>
    %cst_39 = arith.constant dense<0.000000e+00> : vector<2x4xf32>
    %69 = tpu.matmul %68, %0, %cst_39 {dimension_numbers = #tpu.dot_dimension_numbers<[1], [0], [0], [1], [0, 0, 1, 1], [], []>} : vector<2x128xf32>, vector<128x4xf32>, vector<2x4xf32> -> vector<2x4xf32>
    %70 = vector.extract_strided_slice %69 {offsets = [0, 0], sizes = [1, 4], strides = [1, 1]} : vector<2x4xf32> to vector<1x4xf32>
    %cst_40 = arith.constant 0.001953125 : f32
    %71 = vector.broadcast %cst_40 : f32 to vector<1x4xf32>
    %72 = arith.mulf %70, %71 : vector<1x4xf32>
    %73 = vector.extract_strided_slice %69 {offsets = [1, 0], sizes = [1, 4], strides = [1, 1]} : vector<2x4xf32> to vector<1x4xf32>
    %cst_41 = arith.constant 0.001953125 : f32
    %74 = vector.broadcast %cst_41 : f32 to vector<1x4xf32>
    %75 = arith.mulf %73, %74 : vector<1x4xf32>
    %76 = arith.mulf %72, %72 : vector<1x4xf32>
    %77 = arith.subf %75, %76 : vector<1x4xf32>
    %cst_42 = arith.constant 0.000000e+00 : f32
    %78 = vector.broadcast %cst_42 : f32 to vector<1x4xf32>
    %79 = arith.maximumf %77, %78 : vector<1x4xf32>
    %cst_43 = arith.constant 9.99999974E-6 : f32
    %80 = vector.broadcast %cst_43 : f32 to vector<1x4xf32>
    %81 = arith.addf %79, %80 : vector<1x4xf32>
    %82 = math.rsqrt %81 : vector<1x4xf32>
    %83 = arith.mulf %61, %82 : vector<1x4xf32>
    %84 = arith.mulf %72, %83 : vector<1x4xf32>
    %85 = arith.subf %62, %84 : vector<1x4xf32>
    %86 = tpu.concatenate %83, %85 in 0 : vector<1x4xf32>, vector<1x4xf32> -> vector<2x4xf32>
    %cst_44 = arith.constant dense<0.000000e+00> : vector<2x128xf32>
    %87 = tpu.matmul %86, %1, %cst_44 {dimension_numbers = #tpu.dot_dimension_numbers<[1], [0], [0], [1], [0, 0, 1, 1], [], []>} : vector<2x4xf32>, vector<4x128xf32>, vector<2x128xf32> -> vector<2x128xf32>
    %88 = vector.extract_strided_slice %87 {offsets = [0, 0], sizes = [1, 128], strides = [1, 1]} : vector<2x128xf32> to vector<1x128xf32>
    %89 = vector.broadcast %88 : vector<1x128xf32> to vector<32x128xf32>
    %90 = arith.mulf %60, %89 : vector<32x128xf32>
    %91 = vector.extract_strided_slice %87 {offsets = [1, 0], sizes = [1, 128], strides = [1, 1]} : vector<2x128xf32> to vector<1x128xf32>
    %92 = vector.broadcast %91 : vector<1x128xf32> to vector<32x128xf32>
    %93 = arith.addf %90, %92 : vector<32x128xf32>
    %cst_45 = arith.constant 0.000000e+00 : f32
    %94 = vector.broadcast %cst_45 : f32 to vector<32x128xf32>
    %95 = arith.maximumf %93, %94 : vector<32x128xf32>
    %c0_46 = arith.constant 0 : index
    %c0_47 = arith.constant 0 : index
    %96 = vector.load %arg12[%c0_46, %c0_47] : memref<1x128xf32, #tpu.memory_space<vmem>>, vector<1x128xf32>
    %c1_i32_48 = arith.constant 1 : i32
    %97 = tpu.dynamic_rotate %95 by %c1_i32_48 dim 0 : vector<32x128xf32>, i32 -> vector<32x128xf32>
    %98 = arith.mulf %97, %2 : vector<32x128xf32>
    %99 = arith.truncf %98 : vector<32x128xf32> to vector<32x128xbf16>
    %c31_i32_49 = arith.constant 31 : i32
    %100 = tpu.dynamic_rotate %95 by %c31_i32_49 dim 0 : vector<32x128xf32>, i32 -> vector<32x128xf32>
    %101 = arith.mulf %100, %3 : vector<32x128xf32>
    %102 = arith.truncf %101 : vector<32x128xf32> to vector<32x128xbf16>
    %103 = arith.truncf %95 : vector<32x128xf32> to vector<32x128xbf16>
    %c0_50 = arith.constant 0 : index
    %c0_51 = arith.constant 0 : index
    %c0_52 = arith.constant 0 : index
    %104 = vector.load %arg11[%c0_50, %c0_51, %c0_52] : memref<3x128x128xbf16, #tpu.memory_space<vmem>>, vector<1x128x128xbf16>
    %105 = vector.shape_cast %104 : vector<1x128x128xbf16> to vector<128x128xbf16>
    %cst_53 = arith.constant dense<0.000000e+00> : vector<32x128xf32>
    %106 = tpu.matmul %99, %105, %cst_53 {dimension_numbers = #tpu.dot_dimension_numbers<[1], [0], [0], [1], [0, 0, 1, 1], [], []>} : vector<32x128xbf16>, vector<128x128xbf16>, vector<32x128xf32> -> vector<32x128xf32>
    %c1_54 = arith.constant 1 : index
    %c0_55 = arith.constant 0 : index
    %c0_56 = arith.constant 0 : index
    %107 = vector.load %arg11[%c1_54, %c0_55, %c0_56] : memref<3x128x128xbf16, #tpu.memory_space<vmem>>, vector<1x128x128xbf16>
    %108 = vector.shape_cast %107 : vector<1x128x128xbf16> to vector<128x128xbf16>
    %cst_57 = arith.constant dense<0.000000e+00> : vector<32x128xf32>
    %109 = tpu.matmul %103, %108, %cst_57 {dimension_numbers = #tpu.dot_dimension_numbers<[1], [0], [0], [1], [0, 0, 1, 1], [], []>} : vector<32x128xbf16>, vector<128x128xbf16>, vector<32x128xf32> -> vector<32x128xf32>
    %110 = arith.addf %106, %109 : vector<32x128xf32>
    %c2_58 = arith.constant 2 : index
    %c0_59 = arith.constant 0 : index
    %c0_60 = arith.constant 0 : index
    %111 = vector.load %arg11[%c2_58, %c0_59, %c0_60] : memref<3x128x128xbf16, #tpu.memory_space<vmem>>, vector<1x128x128xbf16>
    %112 = vector.shape_cast %111 : vector<1x128x128xbf16> to vector<128x128xbf16>
    %cst_61 = arith.constant dense<0.000000e+00> : vector<32x128xf32>
    %113 = tpu.matmul %102, %112, %cst_61 {dimension_numbers = #tpu.dot_dimension_numbers<[1], [0], [0], [1], [0, 0, 1, 1], [], []>} : vector<32x128xbf16>, vector<128x128xbf16>, vector<32x128xf32> -> vector<32x128xf32>
    %114 = arith.addf %110, %113 : vector<32x128xf32>
    %115 = vector.broadcast %96 : vector<1x128xf32> to vector<32x128xf32>
    %116 = arith.addf %114, %115 : vector<32x128xf32>
    %c0_62 = arith.constant 0 : index
    %c0_63 = arith.constant 0 : index
    %117 = vector.load %arg0[%c0_62, %c0_63] : memref<32x128xf32, #tpu.memory_space<vmem>>, vector<32x128xf32>
    %118 = arith.addf %116, %117 : vector<32x128xf32>
    %c0_64 = arith.constant 0 : index
    %c0_65 = arith.constant 0 : index
    %119 = vector.load %arg13[%c0_64, %c0_65] : memref<32x128xf32, #tpu.memory_space<vmem>>, vector<32x128xf32>
    tpu.vector_store %arg13[%c0_64, %c0_65], %118 {strides = array<i32>} : memref<32x128xf32, #tpu.memory_space<vmem>>, vector<32x128xf32>,
    return
  }
}

</mosaic_0001>

<llo_original>
// kernel: tpu_custom_call.1
$region0: #{tpu_custom_call.1}
  #allocation0 [shape = 'u32[]', space=smem, size = 0x4, offset = 0x4, fixed_abs, tag = 'smem constant byte address 0x4 - core index']
  #allocation1 [shape = 'u32[72,128]{1,0:T(1,128)}', space=vmem, size = 0x9000, scoped, tag = 'internal scratch']
  %s0 = inlined_call_operand.hbm [shape: f32[32,128], index: 0, kind: input, shape index: {}, may-alias: {0,13}]
  %s1 = inlined_call_operand.hbm [shape: f32[32,128], index: 1, kind: input, shape index: {}]
  %s2 = inlined_call_operand.hbm [shape: f32[32,128], index: 2, kind: input, shape index: {}]
  %s3 = inlined_call_operand.vmem [shape: f32[128,4], index: 3, kind: input, shape index: {}]
  %s4 = inlined_call_operand.hbm [shape: f32[4,128], index: 4, kind: input, shape index: {}]
  %s5 = inlined_call_operand.vmem [shape: f32[1,4], index: 5, kind: input, shape index: {}]
  %s6 = inlined_call_operand.vmem [shape: f32[1,4], index: 6, kind: input, shape index: {}]
  %s7 = inlined_call_operand.vmem [shape: bf16[3,128,128], index: 7, kind: input, shape index: {}]
  %s8 = inlined_call_operand.vmem [shape: f32[1,128], index: 8, kind: input, shape index: {}]
  %s9 = inlined_call_operand.vmem [shape: f32[1,4], index: 9, kind: input, shape index: {}]
  %s10 = inlined_call_operand.vmem [shape: f32[1,4], index: 10, kind: input, shape index: {}]
  %s11 = inlined_call_operand.hbm [shape: bf16[3,128,128], index: 11, kind: input, shape index: {}]
  %s12 = inlined_call_operand.vmem [shape: f32[1,128], index: 12, kind: input, shape index: {}]
  %s13 = inlined_call_operand.hbm [shape: f32[32,128], index: 13, kind: output, shape index: {}, may-alias: {0,13}]
  %s14 = sld [smem:[#allocation0]]
  $region82: #{tpu_custom_call.1} parent=0
    _
  %s16 = ssub.s32 1, %s14
  %s17 = scalar_select 0, %s16, %s14
  $region1: #{tpu_custom_call.1} parent=0
    #allocation2 [shape = 'u8[16384]{0}', space=vmem, size = 0x4000, scoped, tag = 'input window, operand 0, single buffered']
    #allocation3 [shape = 's32[1]{0}', space=sflag, size = 0x4, scoped, tag = 'scoped memory for tpu_custom_call.1']
    #allocation4 [shape = 's32[1]{0}', space=sflag, size = 0x4, scoped, tag = 'scoped memory for tpu_custom_call.1']
    #allocation5 [shape = 'u8[16384]{0}', space=vmem, size = 0x4000, scoped, tag = 'input window, operand 1, single buffered']
    #allocation6 [shape = 's32[1]{0}', space=sflag, size = 0x4, scoped, tag = 'scoped memory for tpu_custom_call.1']
    #allocation7 [shape = 'u8[16384]{0}', space=vmem, size = 0x4000, scoped, tag = 'input window, operand 2, single buffered']
    #allocation8 [shape = 'u8[2048]{0}', space=vmem, size = 0x800, scoped, tag = 'input window, operand 4, single buffered']
    #allocation9 [shape = 's32[1]{0}', space=sflag, size = 0x4, scoped, tag = 'scoped memory for tpu_custom_call.1']
    #allocation10 [shape = 'u8[98304]{0}', space=vmem, size = 0x18000, scoped, tag = 'input window, operand 11, single buffered']
    #allocation11 [shape = 'u8[16384]{0}', space=vmem, size = 0x4000, scoped, tag = 'output window, operand 0, single buffered']
    %18 = vsyncpa [#allocation3], 0
    %19 = vsyncpa [#allocation6], 0
    %20 = vsyncpa [#allocation9], 0
    %21 = vsyncpa [#allocation4], 0
    // Predicated region
    $region2: #{tpu_custom_call.1} parent=1 // pred_check
      _
    $region3: #{tpu_custom_call.1} parent=1 // pred_check_branch
      %23 = sbr.rel (0) target = $region5
    $region4: #{tpu_custom_call.1} parent=1 // pred_region
      %25 = vsyncadd [#allocation3], 0
      %s26 = sshll.u32 %s0, 4
      %s27 = int_to_ptr.hbm [resolvable:$true] %s26
      %s28 = sshll.u32 [#allocation2], 4
      %s29 = int_to_ptr.vmem [resolvable:$true] %s28
      %34 = dma.hbm_to_vmem [thread:$0]  %s27, 512, %s29, [#allocation3], 128, 128, 8
    $region5: #{tpu_custom_call.1} parent=1 // pred_fallthru
      _
    // Predicated region
    $region6: #{tpu_custom_call.1} parent=1 // pred_check
      _
    $region7: #{tpu_custom_call.1} parent=1 // pred_check_branch
      %36 = sbr.rel (0) target = $region9
    $region8: #{tpu_custom_call.1} parent=1 // pred_region
      %38 = vsyncadd [#allocation6], 0
      %s39 = sshll.u32 %s1, 4
      %s40 = int_to_ptr.hbm [resolvable:$true] %s39
      %s41 = sshll.u32 [#allocation5], 4
      %s42 = int_to_ptr.vmem [resolvable:$true] %s41
      %47 = dma.hbm_to_vmem [thread:$0]  %s40, 512, %s42, [#allocation6], 128, 128, 8
    $region9: #{tpu_custom_call.1} parent=1 // pred_fallthru
      _
    // Predicated region
    $region10: #{tpu_custom_call.1} parent=1 // pred_check
      _
    $region11: #{tpu_custom_call.1} parent=1 // pred_check_branch
      %49 = sbr.rel (0) target = $region13
    $region12: #{tpu_custom_call.1} parent=1 // pred_region
      %51 = vsyncadd [#allocation6], 0
      %s52 = sshll.u32 %s2, 4
      %s53 = int_to_ptr.hbm [resolvable:$true] %s52
      %s54 = sshll.u32 [#allocation7], 4
      %s55 = int_to_ptr.vmem [resolvable:$true] %s54
      %60 = dma.hbm_to_vmem [thread:$0]  %s53, 512, %s55, [#allocation6], 128, 128, 8
    $region13: #{tpu_custom_call.1} parent=1 // pred_fallthru
      _
    // Predicated region
    $region14: #{tpu_custom_call.1} parent=1 // pred_check
      _
    $region15: #{tpu_custom_call.1} parent=1 // pred_check_branch
      %62 = sbr.rel (0) target = $region17
    $region16: #{tpu_custom_call.1} parent=1 // pred_region
      _
    $region17: #{tpu_custom_call.1} parent=1 // pred_fallthru
      _
    // Predicated region
    $region18: #{tpu_custom_call.1} parent=1 // pred_check
      _
    $region19: #{tpu_custom_call.1} parent=1 // pred_check_branch
      %64 = sbr.rel (0) target = $region21
    $region20: #{tpu_custom_call.1} parent=1 // pred_region
      %66 = vsyncadd [#allocation9], 0
      %s68 = sshll.u32 %s4, 4
      %s69 = int_to_ptr.hbm [resolvable:$true] %s68
      %s70 = sshll.u32 [#allocation8], 4
      %s71 = int_to_ptr.vmem [resolvable:$true] %s70
      %73 = dma.hbm_to_vmem [thread:$0]  %s69, 64, %s71, [#allocation9]
    $region21: #{tpu_custom_call.1} parent=1 // pred_fallthru
      _
    // Predicated region
    $region22: #{tpu_custom_call.1} parent=1 // pred_check
      _
    $region23: #{tpu_custom_call.1} parent=1 // pred_check_branch
      %75 = sbr.rel (0) target = $region25
    $region24: #{tpu_custom_call.1} parent=1 // pred_region
      _
    $region25: #{tpu_custom_call.1} parent=1 // pred_fallthru
      _
    // Predicated region
    $region26: #{tpu_custom_call.1} parent=1 // pred_check
      _
    $region27: #{tpu_custom_call.1} parent=1 // pred_check_branch
      %77 = sbr.rel (0) target = $region29
    $region28: #{tpu_custom_call.1} parent=1 // pred_region
      _
    $region29: #{tpu_custom_call.1} parent=1 // pred_fallthru
      _
    // Predicated region
    $region30: #{tpu_custom_call.1} parent=1 // pred_check
      _
    $region31: #{tpu_custom_call.1} parent=1 // pred_check_branch
      %79 = sbr.rel (0) target = $region33
    $region32: #{tpu_custom_call.1} parent=1 // pred_region
      _
    $region33: #{tpu_custom_call.1} parent=1 // pred_fallthru
      _
    // Predicated region
    $region34: #{tpu_custom_call.1} parent=1 // pred_check
      _
    $region35: #{tpu_custom_call.1} parent=1 // pred_check_branch
      %81 = sbr.rel (0) target = $region37
    $region36: #{tpu_custom_call.1} parent=1 // pred_region
      _
    $region37: #{tpu_custom_call.1} parent=1 // pred_fallthru
      _
    // Predicated region
    $region38: #{tpu_custom_call.1} parent=1 // pred_check
      _
    $region39: #{tpu_custom_call.1} parent=1 // pred_check_branch
      %83 = sbr.rel (0) target = $region41
    $region40: #{tpu_custom_call.1} parent=1 // pred_region
      _
    $region41: #{tpu_custom_call.1} parent=1 // pred_fallthru
      _
    // Predicated region
    $region42: #{tpu_custom_call.1} parent=1 // pred_check
      _
    $region43: #{tpu_custom_call.1} parent=1 // pred_check_branch
      %85 = sbr.rel (0) target = $region45
    $region44: #{tpu_custom_call.1} parent=1 // pred_region
      _
    $region45: #{tpu_custom_call.1} parent=1 // pred_fallthru
      _
    // Predicated region
    $region46: #{tpu_custom_call.1} parent=1 // pred_check
      _
    $region47: #{tpu_custom_call.1} parent=1 // pred_check_branch
      %87 = sbr.rel (0) target = $region49
    $region48: #{tpu_custom_call.1} parent=1 // pred_region
      %89 = vsyncadd [#allocation9], 0
      %s90 = sshll.u32 %s11, 4
      %s91 = int_to_ptr.hbm [resolvable:$true] %s90
      %s92 = sshll.u32 [#allocation10], 4
      %s93 = int_to_ptr.vmem [resolvable:$true] %s92
      %98 = dma.hbm_to_vmem [thread:$0]  %s91, 3072, %s93, [#allocation9], 64, 64, 4
    $region49: #{tpu_custom_call.1} parent=1 // pred_fallthru
      _
    // Predicated region
    $region50: #{tpu_custom_call.1} parent=1 // pred_check
      _
    $region51: #{tpu_custom_call.1} parent=1 // pred_check_branch
      %100 = sbr.rel (0) target = $region53
    $region52: #{tpu_custom_call.1} parent=1 // pred_region
      _
    $region53: #{tpu_custom_call.1} parent=1 // pred_fallthru
      _
    // Predicated region
    $region54: #{tpu_custom_call.1} parent=1 // pred_check
      _
    $region55: #{tpu_custom_call.1} parent=1 // pred_check_branch
      %102 = sbr.rel (0) target = $region57
    $region56: #{tpu_custom_call.1} parent=1 // pred_region
      %104 = dma.done [#allocation3], 512
    $region57: #{tpu_custom_call.1} parent=1 // pred_fallthru
      _
    // Predicated region
    $region58: #{tpu_custom_call.1} parent=1 // pred_check
      _
    $region59: #{tpu_custom_call.1} parent=1 // pred_check_branch
      %106 = sbr.rel (0) target = $region61
    $region60: #{tpu_custom_call.1} parent=1 // pred_region
      %108 = dma.done [#allocation6], 512
    $region61: #{tpu_custom_call.1} parent=1 // pred_fallthru
      _
    // Predicated region
    $region62: #{tpu_custom_call.1} parent=1 // pred_check
      _
    $region63: #{tpu_custom_call.1} parent=1 // pred_check_branch
      %110 = sbr.rel (0) target = $region65
    $region64: #{tpu_custom_call.1} parent=1 // pred_region
      %112 = dma.done [#allocation6], 512
    $region65: #{tpu_custom_call.1} parent=1 // pred_fallthru
      _
    // Predicated region
    $region66: #{tpu_custom_call.1} parent=1 // pred_check
      _
    $region67: #{tpu_custom_call.1} parent=1 // pred_check_branch
      %114 = sbr.rel (0) target = $region69
    $region68: #{tpu_custom_call.1} parent=1 // pred_region
      %116 = dma.done [#allocation9], 64
    $region69: #{tpu_custom_call.1} parent=1 // pred_fallthru
      _
    // Predicated region
    $region70: #{tpu_custom_call.1} parent=1 // pred_check
      _
    $region71: #{tpu_custom_call.1} parent=1 // pred_check_branch
      %118 = sbr.rel (0) target = $region73
    $region72: #{tpu_custom_call.1} parent=1 // pred_region
      %120 = dma.done [#allocation9], 3072
    $region73: #{tpu_custom_call.1} parent=1 // pred_fallthru
      _
    %v121 = vld [vmem:[%s3] sm:$0xff]
    %v122 = vld [vmem:[%s3 + $0x8] sm:$0xff]
    %v123 = vld [vmem:[%s3 + $0x10] sm:$0xff]
    %v124 = vld [vmem:[%s3 + $0x18] sm:$0xff]
    %v125 = vld [vmem:[%s3 + $0x20] sm:$0xff]
    %v126 = vld [vmem:[%s3 + $0x28] sm:$0xff]
    %v127 = vld [vmem:[%s3 + $0x30] sm:$0xff]
    %v128 = vld [vmem:[%s3 + $0x38] sm:$0xff]
    %v129 = vld [vmem:[%s3 + $0x40] sm:$0xff]
    %v130 = vld [vmem:[%s3 + $0x48] sm:$0xff]
    %v131 = vld [vmem:[%s3 + $0x50] sm:$0xff]
    %v132 = vld [vmem:[%s3 + $0x58] sm:$0xff]
    %v133 = vld [vmem:[%s3 + $0x60] sm:$0xff]
    %v134 = vld [vmem:[%s3 + $0x68] sm:$0xff]
    %v135 = vld [vmem:[%s3 + $0x70] sm:$0xff]
    %v136 = vld [vmem:[%s3 + $0x78] sm:$0xff]
    %v137 = vld [vmem:[#allocation8] sm:$0xf]
    %v138 = vld [vmem:[#allocation5] sm:$0xff]
    %v139 = vld [vmem:[#allocation5 + $0x8] sm:$0xff]
    %v140 = vld [vmem:[#allocation5 + $0x10] sm:$0xff]
    %v141 = vld [vmem:[#allocation5 + $0x18] sm:$0xff]
    %v142 = vld [vmem:[#allocation7] sm:$0xff]
    %v143 = vld [vmem:[#allocation7 + $0x8] sm:$0xff]
    %v144 = vld [vmem:[#allocation7 + $0x10] sm:$0xff]
    %v145 = vld [vmem:[#allocation7 + $0x18] sm:$0xff]
    %v146 = vld [vmem:[#allocation2] sm:$0xff]
    %v147 = vld [vmem:[#allocation2 + $0x8] sm:$0xff]
    %v148 = vld [vmem:[#allocation2 + $0x10] sm:$0xff]
    %v149 = vld [vmem:[#allocation2 + $0x18] sm:$0xff]
    %v150 = vld [vmem:[%s5] sm:$0x1]
    %v151 = vld [vmem:[%s6] sm:$0x1]
    %v152 = vadd.f32 %v146, %v147
    %v153 = vadd.f32 %v152, %v148
    %v154 = vadd.f32 %v153, %v149
    %v155 = vrot.slane %v154, 4
    %v156 = vadd.f32 %v154, %v155
    %v157 = vrot.slane %v156, 2
    %v158 = vadd.f32 %v156, %v157
    %v159 = vrot.slane %v158, 1
    %v160 = vadd.f32 %v158, %v159
    %v161 = vmul.f32 %v146, %v146
    %v162 = vmul.f32 %v147, %v147
    %v163 = vmul.f32 %v148, %v148
    %v164 = vmul.f32 %v149, %v149
    %v165 = vadd.f32 %v161, %v162
    %v166 = vadd.f32 %v165, %v163
    %v167 = vadd.f32 %v166, %v164
    %v168 = vrot.slane %v167, 4
    %v169 = vadd.f32 %v167, %v168
    %v170 = vrot.slane %v169, 2
    %v171 = vadd.f32 %v169, %v170
    %v172 = vrot.slane %v171, 1
    %v173 = vadd.f32 %v171, %v172
    %vm174 = vcmask 1040384
    %v175 = vsel %vm174, %v160, %v173
    %176 = vmatpush.msra.mxu0 %v136
    %177 = vmatpush.msra.mxu0 %v135
    %178 = vmatpush.msra.mxu0 %v134
    %179 = vmatpush.msra.mxu0 %v133
    %180 = vmatpush.msra.mxu0 %v132
    %181 = vmatpush.msra.mxu0 %v131
    %182 = vmatpush.msra.mxu0 %v130
    %183 = vmatpush.msra.mxu0 %v129
    %184 = vmatpush.msra.mxu0 %v128
    %185 = vmatpush.msra.mxu0 %v127
    %186 = vmatpush.msra.mxu0 %v126
    %187 = vmatpush.msra.mxu0 %v125
    %188 = vmatpush.msra.mxu0 %v124
    %189 = vmatpush.msra.mxu0 %v123
    %190 = vmatpush.msra.mxu0 %v122
    %191 = vmatpush.msra.mxu0 %v121
    %192 = vmatmul.f32.gmra.mxu0 %v175
    %v193 = vpop.f32.mrf.mxu0
    %v194 = vadd.f32 0.0, %v193
    %195 = vdwg.mxu0
    %v196 = vmul.f32 %v194, 0.001953125
    %v197 = vmul.f32 %v196, %v196
    %v199 = vrot.slane %v197, 7
    %v201 = vsub.f32 %v196, %v199
    %v202 = vmax.f32 %v201, 0.0
    %v203 = vadd.f32 %v202, 1e-05
    %v204 = vrsqrt.pop %v203
    %v205 = vmul.f32 %v204, %v203
    %v206 = vmul.f32 %v205, %v204
    %v207 = vmul.f32 0.5, %v206
    %v208 = vsub.f32 1.5, %v207
    %v209 = vmul.f32 %v204, %v208
    %vm210 = vweird.f32 %v203
    %vm211 = vweird.f32 %v204
    %vm212 = vmor %vm210, %vm211
    %v213 = vsel %vm212, %v204, %v209
    %215 = vst [vmem:[#allocation1] sm:$0xff] %v213
    %s216 = scalar_lea.vmem [#allocation1], 1
    %v217 = vld [vmem:[%s216] ss:$9 sm:$0xff]
    %v219 = vmul.f32 %v150, %v217
    %v220 = vmul.f32 %v196, %v219
    %v221 = vsub.f32 %v151, %v220
    %v223 = vperm.slane %v221, 0
    %v225 = vsel %vm174, %v219, %v223
    %vm226 = vcmask 31744
    %v228 = vsel %vm226, %v225, 0
    %vm230 = vcmask 1043456
    %v232 = vsel %vm230, %v137, 0
    %234 = vmatpush.msra.mxu0 0.0
    %235 = vmatpush.msra.mxu0 0.0
    %236 = vmatpush.msra.mxu0 0.0
    %237 = vmatpush.msra.mxu0 0.0
    %238 = vmatpush.msra.mxu0 0.0
    %239 = vmatpush.msra.mxu0 0.0
    %240 = vmatpush.msra.mxu0 0.0
    %241 = vmatpush.msra.mxu0 0.0
    %242 = vmatpush.msra.mxu0 0.0
    %243 = vmatpush.msra.mxu0 0.0
    %244 = vmatpush.msra.mxu0 0.0
    %245 = vmatpush.msra.mxu0 0.0
    %246 = vmatpush.msra.mxu0 0.0
    %247 = vmatpush.msra.mxu0 0.0
    %248 = vmatpush.msra.mxu0 0.0
    %249 = vmatpush.msra.mxu0 %v232
    %250 = vmatmul.f32.gmra.mxu0 %v228
    %v251 = vpop.f32.mrf.mxu0
    %v252 = vadd.f32 0.0, %v251
    %253 = vdwg.mxu0
    %v254 = vperm.slane %v252, 0
    %v255 = vmul.f32 %v146, %v254
    %v256 = vmul.f32 %v147, %v254
    %v257 = vmul.f32 %v148, %v254
    %v258 = vmul.f32 %v149, %v254
    %v259 = vperm.slane %v252, 1
    %v260 = vadd.f32 %v255, %v259
    %v261 = vadd.f32 %v256, %v259
    %v262 = vadd.f32 %v257, %v259
    %v263 = vadd.f32 %v258, %v259
    %v264 = vmax.f32 %v260, 0.0
    %v265 = vmax.f32 %v261, 0.0
    %v266 = vmax.f32 %v262, 0.0
    %v267 = vmax.f32 %v263, 0.0
    %v268 = vld [vmem:[%s8] sm:$0x1]
    %v269 = vrot.slane %v264, 7
    %v270 = vrot.slane %v265, 7
    %v271 = vrot.slane %v266, 7
    %v272 = vrot.slane %v267, 7
    %v273 = vlaneseq
    %v274 = vshrl.u32 %v273, 7
    %vm275 = vcmp.lt.s32.totalorder %v274, 1
    %v276 = vsel %vm275, %v271, %v272
    %v277 = vsel %vm275, %v270, %v271
    %v278 = vsel %vm275, %v269, %v270
    %v279 = vsel %vm275, %v272, %v269
    %v280 = vmul.f32 %v279, %v138
    %v281 = vmul.f32 %v278, %v139
    %v282 = vmul.f32 %v277, %v140
    %v283 = vmul.f32 %v276, %v141
    %v284 = vpack.c.bf16 %v281, %v280
    %v285 = vpack.c.bf16 %v283, %v282
    %v286 = vrot.slane %v264, 1
    %v287 = vrot.slane %v265, 1
    %v288 = vrot.slane %v266, 1
    %v289 = vrot.slane %v267, 1
    %vm290 = vcmp.lt.s32.totalorder %v274, 7
    %v291 = vsel %vm290, %v288, %v289
    %v292 = vsel %vm290, %v287, %v288
    %v293 = vsel %vm290, %v286, %v287
    %v294 = vsel %vm290, %v289, %v286
    %v295 = vmul.f32 %v293, %v142
    %v296 = vmul.f32 %v292, %v143
    %v297 = vmul.f32 %v291, %v144
    %v298 = vmul.f32 %v294, %v145
    %v299 = vpack.c.bf16 %v296, %v295
    %v300 = vpack.c.bf16 %v298, %v297
    %v301 = vpack.c.bf16 %v265, %v264
    %v302 = vpack.c.bf16 %v267, %v266
    %v303 = vld [vmem:[%s7] sm:$0xf]
    %v304 = vld [vmem:[%s7 + $0x4] sm:$0xf]
    %v305 = vld [vmem:[%s7 + $0x8] sm:$0xf]
    %v306 = vld [vmem:[%s7 + $0xc] sm:$0xf]
    %v307 = vld [vmem:[%s7 + $0x10] sm:$0xf]
    %v308 = vld [vmem:[%s7 + $0x14] sm:$0xf]
    %v309 = vld [vmem:[%s7 + $0x18] sm:$0xf]
    %v310 = vld [vmem:[%s7 + $0x1c] sm:$0xf]
    %v311 = vld [vmem:[%s7 + $0x20] sm:$0xf]
    %v312 = vld [vmem:[%s7 + $0x24] sm:$0xf]
    %v313 = vld [vmem:[%s7 + $0x28] sm:$0xf]
    %v314 = vld [vmem:[%s7 + $0x2c] sm:$0xf]
    %v315 = vld [vmem:[%s7 + $0x30] sm:$0xf]
    %v316 = vld [vmem:[%s7 + $0x34] sm:$0xf]
    %v317 = vld [vmem:[%s7 + $0x38] sm:$0xf]
    %v318 = vld [vmem:[%s7 + $0x3c] sm:$0xf]
    %s319 = scalar_lea.vmem %s7, 64
    %v320 = vld [vmem:[%s319] sm:$0xf]
    %v321 = vld [vmem:[%s319 + $0x4] sm:$0xf]
    %v322 = vld [vmem:[%s319 + $0x8] sm:$0xf]
    %v323 = vld [vmem:[%s319 + $0xc] sm:$0xf]
    %v324 = vld [vmem:[%s319 + $0x10] sm:$0xf]
    %v325 = vld [vmem:[%s319 + $0x14] sm:$0xf]
    %v326 = vld [vmem:[%s319 + $0x18] sm:$0xf]
    %v327 = vld [vmem:[%s319 + $0x1c] sm:$0xf]
    %v328 = vld [vmem:[%s319 + $0x20] sm:$0xf]
    %v329 = vld [vmem:[%s319 + $0x24] sm:$0xf]
    %v330 = vld [vmem:[%s319 + $0x28] sm:$0xf]
    %v331 = vld [vmem:[%s319 + $0x2c] sm:$0xf]
    %v332 = vld [vmem:[%s319 + $0x30] sm:$0xf]
    %v333 = vld [vmem:[%s319 + $0x34] sm:$0xf]
    %v334 = vld [vmem:[%s319 + $0x38] sm:$0xf]
    %v335 = vld [vmem:[%s319 + $0x3c] sm:$0xf]
    %v352 = vunpack.c.l.b16 %v320
    %v353 = vunpack.c.l.b16 %v321
    %v354 = vunpack.c.l.b16 %v322
    %v355 = vunpack.c.l.b16 %v323
    %v356 = vunpack.c.l.b16 %v324
    %v357 = vunpack.c.l.b16 %v325
    %v358 = vunpack.c.l.b16 %v326
    %v359 = vunpack.c.l.b16 %v327
    %v360 = vunpack.c.l.b16 %v328
    %v361 = vunpack.c.l.b16 %v329
    %v362 = vunpack.c.l.b16 %v330
    %v363 = vunpack.c.l.b16 %v331
    %v364 = vunpack.c.l.b16 %v332
    %v365 = vunpack.c.l.b16 %v333
    %v366 = vunpack.c.l.b16 %v334
    %v367 = vunpack.c.l.b16 %v335
    %v368 = vpack.c.b16 %v353, %v352
    %v369 = vpack.c.b16 %v355, %v354
    %v370 = vpack.c.b16 %v357, %v356
    %v371 = vpack.c.b16 %v359, %v358
    %v372 = vpack.c.b16 %v361, %v360
    %v373 = vpack.c.b16 %v363, %v362
    %v374 = vpack.c.b16 %v365, %v364
    %v375 = vpack.c.b16 %v367, %v366
    %384 = vmatpush.bf16.msra.mxu0 %v375
    %385 = vmatpush.bf16.msra.mxu0 %v374
    %386 = vmatpush.bf16.msra.mxu0 %v373
    %387 = vmatpush.bf16.msra.mxu0 %v372
    %388 = vmatpush.bf16.msra.mxu0 %v371
    %389 = vmatpush.bf16.msra.mxu0 %v370
    %390 = vmatpush.bf16.msra.mxu0 %v369
    %391 = vmatpush.bf16.msra.mxu0 %v368
    %392 = vmatmul.bf16.gmra.mxu0 %v301
    %v393 = vpop.f32.mrf.mxu0
    %v394 = vadd.f32 0.0, %v393
    %v395 = vpop.f32.mrf.mxu0
    %v396 = vadd.f32 0.0, %v395
    %397 = vmatmul.bf16.gmra.mxu0 %v302
    %v398 = vpop.f32.mrf.mxu0
    %v399 = vadd.f32 0.0, %v398
    %v400 = vpop.f32.mrf.mxu0
    %v401 = vadd.f32 0.0, %v400
    %402 = vdwg.mxu0
    %v419 = vunpack.c.l.b16 %v303
    %v420 = vunpack.c.l.b16 %v304
    %v421 = vunpack.c.l.b16 %v305
    %v422 = vunpack.c.l.b16 %v306
    %v423 = vunpack.c.l.b16 %v307
    %v424 = vunpack.c.l.b16 %v308
    %v425 = vunpack.c.l.b16 %v309
    %v426 = vunpack.c.l.b16 %v310
    %v427 = vunpack.c.l.b16 %v311
    %v428 = vunpack.c.l.b16 %v312
    %v429 = vunpack.c.l.b16 %v313
    %v430 = vunpack.c.l.b16 %v314
    %v431 = vunpack.c.l.b16 %v315
    %v432 = vunpack.c.l.b16 %v316
    %v433 = vunpack.c.l.b16 %v317
    %v434 = vunpack.c.l.b16 %v318
    %v435 = vpack.c.b16 %v420, %v419
    %v436 = vpack.c.b16 %v422, %v421
    %v437 = vpack.c.b16 %v424, %v423
    %v438 = vpack.c.b16 %v426, %v425
    %v439 = vpack.c.b16 %v428, %v427
    %v440 = vpack.c.b16 %v430, %v429
    %v441 = vpack.c.b16 %v432, %v431
    %v442 = vpack.c.b16 %v434, %v433
    %451 = vmatpush.bf16.msra.mxu0 %v442
    %452 = vmatpush.bf16.msra.mxu0 %v441
    %453 = vmatpush.bf16.msra.mxu0 %v440
    %454 = vmatpush.bf16.msra.mxu0 %v439
    %455 = vmatpush.bf16.msra.mxu0 %v438
    %456 = vmatpush.bf16.msra.mxu0 %v437
    %457 = vmatpush.bf16.msra.mxu0 %v436
    %458 = vmatpush.bf16.msra.mxu0 %v435
    %459 = vmatmul.bf16.gmra.mxu0 %v284
    %v460 = vpop.f32.mrf.mxu0
    %v461 = vadd.f32 %v394, %v460
    %v462 = vpop.f32.mrf.mxu0
    %v463 = vadd.f32 %v396, %v462
    %464 = vmatmul.bf16.gmra.mxu0 %v285
    %v465 = vpop.f32.mrf.mxu0
    %v466 = vadd.f32 %v399, %v465
    %v467 = vpop.f32.mrf.mxu0
    %v468 = vadd.f32 %v401, %v467
    %469 = vdwg.mxu0
    %s470 = scalar_lea.vmem %s7, 128
    %v471 = vld [vmem:[%s470] sm:$0xf]
    %v472 = vld [vmem:[%s470 + $0x4] sm:$0xf]
    %v473 = vld [vmem:[%s470 + $0x8] sm:$0xf]
    %v474 = vld [vmem:[%s470 + $0xc] sm:$0xf]
    %v475 = vld [vmem:[%s470 + $0x10] sm:$0xf]
    %v476 = vld [vmem:[%s470 + $0x14] sm:$0xf]
    %v477 = vld [vmem:[%s470 + $0x18] sm:$0xf]
    %v478 = vld [vmem:[%s470 + $0x1c] sm:$0xf]
    %v479 = vld [vmem:[%s470 + $0x20] sm:$0xf]
    %v480 = vld [vmem:[%s470 + $0x24] sm:$0xf]
    %v481 = vld [vmem:[%s470 + $0x28] sm:$0xf]
    %v482 = vld [vmem:[%s470 + $0x2c] sm:$0xf]
    %v483 = vld [vmem:[%s470 + $0x30] sm:$0xf]
    %v484 = vld [vmem:[%s470 + $0x34] sm:$0xf]
    %v485 = vld [vmem:[%s470 + $0x38] sm:$0xf]
    %v486 = vld [vmem:[%s470 + $0x3c] sm:$0xf]
    %v503 = vunpack.c.l.b16 %v471
    %v504 = vunpack.c.l.b16 %v472
    %v505 = vunpack.c.l.b16 %v473
    %v506 = vunpack.c.l.b16 %v474
    %v507 = vunpack.c.l.b16 %v475
    %v508 = vunpack.c.l.b16 %v476
    %v509 = vunpack.c.l.b16 %v477
    %v510 = vunpack.c.l.b16 %v478
    %v511 = vunpack.c.l.b16 %v479
    %v512 = vunpack.c.l.b16 %v480
    %v513 = vunpack.c.l.b16 %v481
    %v514 = vunpack.c.l.b16 %v482
    %v515 = vunpack.c.l.b16 %v483
    %v516 = vunpack.c.l.b16 %v484
    %v517 = vunpack.c.l.b16 %v485
    %v518 = vunpack.c.l.b16 %v486
    %v519 = vpack.c.b16 %v504, %v503
    %v520 = vpack.c.b16 %v506, %v505
    %v521 = vpack.c.b16 %v508, %v507
    %v522 = vpack.c.b16 %v510, %v509
    %v523 = vpack.c.b16 %v512, %v511
    %v524 = vpack.c.b16 %v514, %v513
    %v525 = vpack.c.b16 %v516, %v515
    %v526 = vpack.c.b16 %v518, %v517
    %535 = vmatpush.bf16.msra.mxu0 %v526
    %536 = vmatpush.bf16.msra.mxu0 %v525
    %537 = vmatpush.bf16.msra.mxu0 %v524
    %538 = vmatpush.bf16.msra.mxu0 %v523
    %539 = vmatpush.bf16.msra.mxu0 %v522
    %540 = vmatpush.bf16.msra.mxu0 %v521
    %541 = vmatpush.bf16.msra.mxu0 %v520
    %542 = vmatpush.bf16.msra.mxu0 %v519
    %543 = vmatmul.bf16.gmra.mxu0 %v299
    %v544 = vpop.f32.mrf.mxu0
    %v545 = vadd.f32 0.0, %v544
    %v546 = vpop.f32.mrf.mxu0
    %v547 = vadd.f32 0.0, %v546
    %548 = vmatmul.bf16.gmra.mxu0 %v300
    %v549 = vpop.f32.mrf.mxu0
    %v550 = vadd.f32 0.0, %v549
    %v551 = vpop.f32.mrf.mxu0
    %v552 = vadd.f32 0.0, %v551
    %553 = vdwg.mxu0
    %v554 = vadd.f32 %v461, %v545
    %v555 = vadd.f32 %v463, %v547
    %v556 = vadd.f32 %v466, %v550
    %v557 = vadd.f32 %v468, %v552
    %v559 = vperm.slane %v268, 0
    %v561 = vadd.f32 %v554, %v559
    %v562 = vadd.f32 %v555, %v559
    %v563 = vadd.f32 %v556, %v559
    %v564 = vadd.f32 %v557, %v559
    %v565 = vld [vmem:[%s9] sm:$0x1]
    %v566 = vld [vmem:[%s10] sm:$0x1]
    %v567 = vadd.f32 %v561, %v562
    %v568 = vadd.f32 %v567, %v563
    %v569 = vadd.f32 %v568, %v564
    %v570 = vrot.slane %v569, 4
    %v571 = vadd.f32 %v569, %v570
    %v572 = vrot.slane %v571, 2
    %v573 = vadd.f32 %v571, %v572
    %v574 = vrot.slane %v573, 1
    %v575 = vadd.f32 %v573, %v574
    %v576 = vmul.f32 %v561, %v561
    %v577 = vmul.f32 %v562, %v562
    %v578 = vmul.f32 %v563, %v563
    %v579 = vmul.f32 %v564, %v564
    %v580 = vadd.f32 %v576, %v577
    %v581 = vadd.f32 %v580, %v578
    %v582 = vadd.f32 %v581, %v579
    %v583 = vrot.slane %v582, 4
    %v584 = vadd.f32 %v582, %v583
    %v585 = vrot.slane %v584, 2
    %v586 = vadd.f32 %v584, %v585
    %v587 = vrot.slane %v586, 1
    %v588 = vadd.f32 %v586, %v587
    %v589 = vsel %vm174, %v575, %v588
    %590 = vmatpush.msra.mxu0 %v136
    %591 = vmatpush.msra.mxu0 %v135
    %592 = vmatpush.msra.mxu0 %v134
    %593 = vmatpush.msra.mxu0 %v133
    %594 = vmatpush.msra.mxu0 %v132
    %595 = vmatpush.msra.mxu0 %v131
    %596 = vmatpush.msra.mxu0 %v130
    %597 = vmatpush.msra.mxu0 %v129
    %598 = vmatpush.msra.mxu0 %v128
    %599 = vmatpush.msra.mxu0 %v127
    %600 = vmatpush.msra.mxu0 %v126
    %601 = vmatpush.msra.mxu0 %v125
    %602 = vmatpush.msra.mxu0 %v124
    %603 = vmatpush.msra.mxu0 %v123
    %604 = vmatpush.msra.mxu0 %v122
    %605 = vmatpush.msra.mxu0 %v121
    %606 = vmatmul.f32.gmra.mxu0 %v589
    %v607 = vpop.f32.mrf.mxu0
    %v608 = vadd.f32 0.0, %v607
    %609 = vdwg.mxu0
    %v610 = vmul.f32 %v608, 0.001953125
    %v611 = vmul.f32 %v610, %v610
    %v613 = vrot.slane %v611, 7
    %v615 = vsub.f32 %v610, %v613
    %v616 = vmax.f32 %v615, 0.0
    %v617 = vadd.f32 %v616, 1e-05
    %v618 = vrsqrt.pop %v617
    %v619 = vmul.f32 %v618, %v617
    %v620 = vmul.f32 %v619, %v618
    %v621 = vmul.f32 0.5, %v620
    %v622 = vsub.f32 1.5, %v621
    %v623 = vmul.f32 %v618, %v622
    %vm624 = vweird.f32 %v617
    %vm625 = vweird.f32 %v618
    %vm626 = vmor %vm624, %vm625
    %v627 = vsel %vm626, %v618, %v623
    %629 = vst [vmem:[#allocation1] sm:$0xff] %v627
    %s630 = scalar_lea.vmem [#allocation1], 1
    %v631 = vld [vmem:[%s630] ss:$9 sm:$0xff]
    %v633 = vmul.f32 %v565, %v631
    %v634 = vmul.f32 %v610, %v633
    %v635 = vsub.f32 %v566, %v634
    %v637 = vperm.slane %v635, 0
    %v639 = vsel %vm174, %v633, %v637
    %v641 = vsel %vm226, %v639, 0
    %643 = vmatpush.msra.mxu0 0.0
    %644 = vmatpush.msra.mxu0 0.0
    %645 = vmatpush.msra.mxu0 0.0
    %646 = vmatpush.msra.mxu0 0.0
    %647 = vmatpush.msra.mxu0 0.0
    %648 = vmatpush.msra.mxu0 0.0
    %649 = vmatpush.msra.mxu0 0.0
    %650 = vmatpush.msra.mxu0 0.0
    %651 = vmatpush.msra.mxu0 0.0
    %652 = vmatpush.msra.mxu0 0.0
    %653 = vmatpush.msra.mxu0 0.0
    %654 = vmatpush.msra.mxu0 0.0
    %655 = vmatpush.msra.mxu0 0.0
    %656 = vmatpush.msra.mxu0 0.0
    %657 = vmatpush.msra.mxu0 0.0
    %658 = vmatpush.msra.mxu0 %v232
    %659 = vmatmul.f32.gmra.mxu0 %v641
    %v660 = vpop.f32.mrf.mxu0
    %v661 = vadd.f32 0.0, %v660
    %662 = vdwg.mxu0
    %v663 = vperm.slane %v661, 0
    %v664 = vmul.f32 %v561, %v663
    %v665 = vmul.f32 %v562, %v663
    %v666 = vmul.f32 %v563, %v663
    %v667 = vmul.f32 %v564, %v663
    %v668 = vperm.slane %v661, 1
    %v669 = vadd.f32 %v664, %v668
    %v670 = vadd.f32 %v665, %v668
    %v671 = vadd.f32 %v666, %v668
    %v672 = vadd.f32 %v667, %v668
    %v673 = vmax.f32 %v669, 0.0
    %v674 = vmax.f32 %v670, 0.0
    %v675 = vmax.f32 %v671, 0.0
    %v676 = vmax.f32 %v672, 0.0
    %v677 = vld [vmem:[%s12] sm:$0x1]
    %v678 = vrot.slane %v673, 7
    %v679 = vrot.slane %v674, 7
    %v680 = vrot.slane %v675, 7
    %v681 = vrot.slane %v676, 7
    %v682 = vsel %vm275, %v680, %v681
    %v683 = vsel %vm275, %v679, %v680
    %v684 = vsel %vm275, %v678, %v679
    %v685 = vsel %vm275, %v681, %v678
    %v686 = vmul.f32 %v685, %v138
    %v687 = vmul.f32 %v684, %v139
    %v688 = vmul.f32 %v683, %v140
    %v689 = vmul.f32 %v682, %v141
    %v690 = vpack.c.bf16 %v687, %v686
    %v691 = vpack.c.bf16 %v689, %v688
    %v692 = vrot.slane %v673, 1
    %v693 = vrot.slane %v674, 1
    %v694 = vrot.slane %v675, 1
    %v695 = vrot.slane %v676, 1
    %v696 = vsel %vm290, %v694, %v695
    %v697 = vsel %vm290, %v693, %v694
    %v698 = vsel %vm290, %v692, %v693
    %v699 = vsel %vm290, %v695, %v692
    %v700 = vmul.f32 %v698, %v142
    %v701 = vmul.f32 %v697, %v143
    %v702 = vmul.f32 %v696, %v144
    %v703 = vmul.f32 %v699, %v145
    %v704 = vpack.c.bf16 %v701, %v700
    %v705 = vpack.c.bf16 %v703, %v702
    %v706 = vpack.c.bf16 %v674, %v673
    %v707 = vpack.c.bf16 %v676, %v675
    %v708 = vld [vmem:[#allocation10] sm:$0xf]
    %v709 = vld [vmem:[#allocation10 + $0x4] sm:$0xf]
    %v710 = vld [vmem:[#allocation10 + $0x8] sm:$0xf]
    %v711 = vld [vmem:[#allocation10 + $0xc] sm:$0xf]
    %v712 = vld [vmem:[#allocation10 + $0x10] sm:$0xf]
    %v713 = vld [vmem:[#allocation10 + $0x14] sm:$0xf]
    %v714 = vld [vmem:[#allocation10 + $0x18] sm:$0xf]
    %v715 = vld [vmem:[#allocation10 + $0x1c] sm:$0xf]
    %v716 = vld [vmem:[#allocation10 + $0x20] sm:$0xf]
    %v717 = vld [vmem:[#allocation10 + $0x24] sm:$0xf]
    %v718 = vld [vmem:[#allocation10 + $0x28] sm:$0xf]
    %v719 = vld [vmem:[#allocation10 + $0x2c] sm:$0xf]
    %v720 = vld [vmem:[#allocation10 + $0x30] sm:$0xf]
    %v721 = vld [vmem:[#allocation10 + $0x34] sm:$0xf]
    %v722 = vld [vmem:[#allocation10 + $0x38] sm:$0xf]
    %v723 = vld [vmem:[#allocation10 + $0x3c] sm:$0xf]
    %s724 = scalar_lea.vmem [#allocation10], 64
    %v725 = vld [vmem:[%s724] sm:$0xf]
    %v726 = vld [vmem:[%s724 + $0x4] sm:$0xf]
    %v727 = vld [vmem:[%s724 + $0x8] sm:$0xf]
    %v728 = vld [vmem:[%s724 + $0xc] sm:$0xf]
    %v729 = vld [vmem:[%s724 + $0x10] sm:$0xf]
    %v730 = vld [vmem:[%s724 + $0x14] sm:$0xf]
    %v731 = vld [vmem:[%s724 + $0x18] sm:$0xf]
    %v732 = vld [vmem:[%s724 + $0x1c] sm:$0xf]
    %v733 = vld [vmem:[%s724 + $0x20] sm:$0xf]
    %v734 = vld [vmem:[%s724 + $0x24] sm:$0xf]
    %v735 = vld [vmem:[%s724 + $0x28] sm:$0xf]
    %v736 = vld [vmem:[%s724 + $0x2c] sm:$0xf]
    %v737 = vld [vmem:[%s724 + $0x30] sm:$0xf]
    %v738 = vld [vmem:[%s724 + $0x34] sm:$0xf]
    %v739 = vld [vmem:[%s724 + $0x38] sm:$0xf]
    %v740 = vld [vmem:[%s724 + $0x3c] sm:$0xf]
    %v757 = vunpack.c.l.b16 %v725
    %v758 = vunpack.c.l.b16 %v726
    %v759 = vunpack.c.l.b16 %v727
    %v760 = vunpack.c.l.b16 %v728
    %v761 = vunpack.c.l.b16 %v729
    %v762 = vunpack.c.l.b16 %v730
    %v763 = vunpack.c.l.b16 %v731
    %v764 = vunpack.c.l.b16 %v732
    %v765 = vunpack.c.l.b16 %v733
    %v766 = vunpack.c.l.b16 %v734
    %v767 = vunpack.c.l.b16 %v735
    %v768 = vunpack.c.l.b16 %v736
    %v769 = vunpack.c.l.b16 %v737
    %v770 = vunpack.c.l.b16 %v738
    %v771 = vunpack.c.l.b16 %v739
    %v772 = vunpack.c.l.b16 %v740
    %v773 = vpack.c.b16 %v758, %v757
    %v774 = vpack.c.b16 %v760, %v759
    %v775 = vpack.c.b16 %v762, %v761
    %v776 = vpack.c.b16 %v764, %v763
    %v777 = vpack.c.b16 %v766, %v765
    %v778 = vpack.c.b16 %v768, %v767
    %v779 = vpack.c.b16 %v770, %v769
    %v780 = vpack.c.b16 %v772, %v771
    %789 = vmatpush.bf16.msra.mxu0 %v780
    %790 = vmatpush.bf16.msra.mxu0 %v779
    %791 = vmatpush.bf16.msra.mxu0 %v778
    %792 = vmatpush.bf16.msra.mxu0 %v777
    %793 = vmatpush.bf16.msra.mxu0 %v776
    %794 = vmatpush.bf16.msra.mxu0 %v775
    %795 = vmatpush.bf16.msra.mxu0 %v774
    %796 = vmatpush.bf16.msra.mxu0 %v773
    %797 = vmatmul.bf16.gmra.mxu0 %v706
    %v798 = vpop.f32.mrf.mxu0
    %v799 = vadd.f32 0.0, %v798
    %v800 = vpop.f32.mrf.mxu0
    %v801 = vadd.f32 0.0, %v800
    %802 = vmatmul.bf16.gmra.mxu0 %v707
    %v803 = vpop.f32.mrf.mxu0
    %v804 = vadd.f32 0.0, %v803
    %v805 = vpop.f32.mrf.mxu0
    %v806 = vadd.f32 0.0, %v805
    %807 = vdwg.mxu0
    %v824 = vunpack.c.l.b16 %v708
    %v825 = vunpack.c.l.b16 %v709
    %v826 = vunpack.c.l.b16 %v710
    %v827 = vunpack.c.l.b16 %v711
    %v828 = vunpack.c.l.b16 %v712
    %v829 = vunpack.c.l.b16 %v713
    %v830 = vunpack.c.l.b16 %v714
    %v831 = vunpack.c.l.b16 %v715
    %v832 = vunpack.c.l.b16 %v716
    %v833 = vunpack.c.l.b16 %v717
    %v834 = vunpack.c.l.b16 %v718
    %v835 = vunpack.c.l.b16 %v719
    %v836 = vunpack.c.l.b16 %v720
    %v837 = vunpack.c.l.b16 %v721
    %v838 = vunpack.c.l.b16 %v722
    %v839 = vunpack.c.l.b16 %v723
    %v840 = vpack.c.b16 %v825, %v824
    %v841 = vpack.c.b16 %v827, %v826
    %v842 = vpack.c.b16 %v829, %v828
    %v843 = vpack.c.b16 %v831, %v830
    %v844 = vpack.c.b16 %v833, %v832
    %v845 = vpack.c.b16 %v835, %v834
    %v846 = vpack.c.b16 %v837, %v836
    %v847 = vpack.c.b16 %v839, %v838
    %856 = vmatpush.bf16.msra.mxu0 %v847
    %857 = vmatpush.bf16.msra.mxu0 %v846
    %858 = vmatpush.bf16.msra.mxu0 %v845
    %859 = vmatpush.bf16.msra.mxu0 %v844
    %860 = vmatpush.bf16.msra.mxu0 %v843
    %861 = vmatpush.bf16.msra.mxu0 %v842
    %862 = vmatpush.bf16.msra.mxu0 %v841
    %863 = vmatpush.bf16.msra.mxu0 %v840
    %864 = vmatmul.bf16.gmra.mxu0 %v690
    %v865 = vpop.f32.mrf.mxu0
    %v866 = vadd.f32 %v799, %v865
    %v867 = vpop.f32.mrf.mxu0
    %v868 = vadd.f32 %v801, %v867
    %869 = vmatmul.bf16.gmra.mxu0 %v691
    %v870 = vpop.f32.mrf.mxu0
    %v871 = vadd.f32 %v804, %v870
    %v872 = vpop.f32.mrf.mxu0
    %v873 = vadd.f32 %v806, %v872
    %874 = vdwg.mxu0
    %s875 = scalar_lea.vmem [#allocation10], 128
    %v876 = vld [vmem:[%s875] sm:$0xf]
    %v877 = vld [vmem:[%s875 + $0x4] sm:$0xf]
    %v878 = vld [vmem:[%s875 + $0x8] sm:$0xf]
    %v879 = vld [vmem:[%s875 + $0xc] sm:$0xf]
    %v880 = vld [vmem:[%s875 + $0x10] sm:$0xf]
    %v881 = vld [vmem:[%s875 + $0x14] sm:$0xf]
    %v882 = vld [vmem:[%s875 + $0x18] sm:$0xf]
    %v883 = vld [vmem:[%s875 + $0x1c] sm:$0xf]
    %v884 = vld [vmem:[%s875 + $0x20] sm:$0xf]
    %v885 = vld [vmem:[%s875 + $0x24] sm:$0xf]
    %v886 = vld [vmem:[%s875 + $0x28] sm:$0xf]
    %v887 = vld [vmem:[%s875 + $0x2c] sm:$0xf]
    %v888 = vld [vmem:[%s875 + $0x30] sm:$0xf]
    %v889 = vld [vmem:[%s875 + $0x34] sm:$0xf]
    %v890 = vld [vmem:[%s875 + $0x38] sm:$0xf]
    %v891 = vld [vmem:[%s875 + $0x3c] sm:$0xf]
    %v908 = vunpack.c.l.b16 %v876
    %v909 = vunpack.c.l.b16 %v877
    %v910 = vunpack.c.l.b16 %v878
    %v911 = vunpack.c.l.b16 %v879
    %v912 = vunpack.c.l.b16 %v880
    %v913 = vunpack.c.l.b16 %v881
    %v914 = vunpack.c.l.b16 %v882
    %v915 = vunpack.c.l.b16 %v883
    %v916 = vunpack.c.l.b16 %v884
    %v917 = vunpack.c.l.b16 %v885
    %v918 = vunpack.c.l.b16 %v886
    %v919 = vunpack.c.l.b16 %v887
    %v920 = vunpack.c.l.b16 %v888
    %v921 = vunpack.c.l.b16 %v889
    %v922 = vunpack.c.l.b16 %v890
    %v923 = vunpack.c.l.b16 %v891
    %v924 = vpack.c.b16 %v909, %v908
    %v925 = vpack.c.b16 %v911, %v910
    %v926 = vpack.c.b16 %v913, %v912
    %v927 = vpack.c.b16 %v915, %v914
    %v928 = vpack.c.b16 %v917, %v916
    %v929 = vpack.c.b16 %v919, %v918
    %v930 = vpack.c.b16 %v921, %v920
    %v931 = vpack.c.b16 %v923, %v922
    %940 = vmatpush.bf16.msra.mxu0 %v931
    %941 = vmatpush.bf16.msra.mxu0 %v930
    %942 = vmatpush.bf16.msra.mxu0 %v929
    %943 = vmatpush.bf16.msra.mxu0 %v928
    %944 = vmatpush.bf16.msra.mxu0 %v927
    %945 = vmatpush.bf16.msra.mxu0 %v926
    %946 = vmatpush.bf16.msra.mxu0 %v925
    %947 = vmatpush.bf16.msra.mxu0 %v924
    %948 = vmatmul.bf16.gmra.mxu0 %v704
    %v949 = vpop.f32.mrf.mxu0
    %v950 = vadd.f32 0.0, %v949
    %v951 = vpop.f32.mrf.mxu0
    %v952 = vadd.f32 0.0, %v951
    %953 = vmatmul.bf16.gmra.mxu0 %v705
    %v954 = vpop.f32.mrf.mxu0
    %v955 = vadd.f32 0.0, %v954
    %v956 = vpop.f32.mrf.mxu0
    %v957 = vadd.f32 0.0, %v956
    %958 = vdwg.mxu0
    %v959 = vadd.f32 %v866, %v950
    %v960 = vadd.f32 %v868, %v952
    %v961 = vadd.f32 %v871, %v955
    %v962 = vadd.f32 %v873, %v957
    %v964 = vperm.slane %v677, 0
    %v966 = vadd.f32 %v959, %v964
    %v967 = vadd.f32 %v960, %v964
    %v968 = vadd.f32 %v961, %v964
    %v969 = vadd.f32 %v962, %v964
    %v970 = vadd.f32 %v966, %v146
    %v971 = vadd.f32 %v967, %v147
    %v972 = vadd.f32 %v968, %v148
    %v973 = vadd.f32 %v969, %v149
    %974 = vst [vmem:[#allocation11] sm:$0xff] %v970
    %975 = vst [vmem:[#allocation11 + $0x8] sm:$0xff] %v971
    %976 = vst [vmem:[#allocation11 + $0x10] sm:$0xff] %v972
    %977 = vst [vmem:[#allocation11 + $0x18] sm:$0xff] %v973
    // Predicated region
    $region74: #{tpu_custom_call.1} parent=1 // pred_check
      _
    $region75: #{tpu_custom_call.1} parent=1 // pred_check_branch
      %979 = sbr.rel (0) target = $region77
    $region76: #{tpu_custom_call.1} parent=1 // pred_region
      %981 = vsyncadd [#allocation4], 0
      %s982 = sshll.u32 [#allocation11], 4
      %s983 = int_to_ptr.vmem [resolvable:$true] %s982
      %s984 = sshll.u32 %s13, 4
      %s985 = int_to_ptr.hbm [resolvable:$true] %s984
      %990 = dma.vmem_to_hbm [thread:$0]  %s983, 512, %s985, [#allocation4], 128, 128, 8
    $region77: #{tpu_custom_call.1} parent=1 // pred_fallthru
      _
    // Predicated region
    $region78: #{tpu_custom_call.1} parent=1 // pred_check
      _
    $region79: #{tpu_custom_call.1} parent=1 // pred_check_branch
      %992 = sbr.rel (0) target = $region81
    $region80: #{tpu_custom_call.1} parent=1 // pred_region
      %994 = dma.done [#allocation4], 512
    $region81: #{tpu_custom_call.1} parent=1 // pred_fallthru
      _
    %995 = vsyncpa [#allocation3], 1
    %996 = vsyncpa [#allocation6], 1
    %997 = vsyncpa [#allocation9], 1
    %998 = vsyncpa [#allocation4], 1

</llo_original>
